<compile_context>
chip_gen: v5e
topology: v5e:2x2
jax: 0.10.0
libtpu: 0.0.40
codegen_flags: <defaults>
</compile_context>

<pallas_src>
import jax
import jax.numpy as jnp
from jax.experimental import pallas as pl
from jax.experimental.pallas import tpu as pltpu


LANE = 128                 # vreg lane width
MAX_BLOCK_ROWS = 2048      # (2048, 128) f32 tile = 1 MiB per buffer
MIN_BLOCK_ROWS = 8         # sublane multiple
SMALL_BATCH_BYTES = 1 << 20  # below this, plain XLA fma beats kernel launch cost


def _round_up(v, m):
    return ((v + m - 1) // m) * m


def affine_kernel(a_ref, c_ref, x_ref, o_ref):
    # a_ref / c_ref: (1, 1) scalars in SMEM; x_ref / o_ref: (block_rows, 128) VMEM.
    o_ref[...] = x_ref[...] * a_ref[0, 0] + c_ref[0, 0]


def model_forward(x, w1, b1, w2, b2, *, min_pallas_bytes=SMALL_BATCH_BYTES):
    """x: (B, 1) f32. w1: (1, 10), b1: (1, 10), w2: (10, 1), b2: (1, 1).

    Computes (x @ w1 + b1) @ w2 + b2 via the folded affine form a*x + c.
    """
    B = x.shape[0]
    x = x.astype(jnp.float32)

    # --- fold the two affine layers (tiny, done once outside the kernel) ---
    a = (w1 @ w2)[0, 0]            # scalar scale
    c = (b1 @ w2 + b2)[0, 0]       # scalar offset

    # --- small-batch fast path: let XLA fuse the scalar fma ---
    if B * 4 < min_pallas_bytes:
        return x * a + c

    scale = jnp.reshape(a, (1, 1)).astype(jnp.float32)
    offset = jnp.reshape(c, (1, 1)).astype(jnp.float32)

    # --- lane-dense layout: flatten (B, 1) -> (rows, 128) ---
    # Pad only up to the next multiple of 128 (<= 127 elements); the partial
    # last *block* along rows is handled by Pallas store masking.
    flat = x.reshape(-1)
    rows = pl.cdiv(B, LANE)
    padded = rows * LANE
    if padded != B:
        flat = jnp.pad(flat, (0, padded - B))
    x2d = flat.reshape(rows, LANE)

    # Block selection: <= 1 MiB per buffer, >= 2 grid steps when rows allows
    # (megacore on v7x), block_rows always a multiple of 8.
    half = _round_up((rows + 1) // 2, MIN_BLOCK_ROWS)
    block_rows = max(MIN_BLOCK_ROWS, min(MAX_BLOCK_ROWS, half))
    block_rows = min(block_rows, _round_up(rows, MIN_BLOCK_ROWS))
    grid = (pl.cdiv(rows, block_rows),)

    smem_scalar = pl.BlockSpec(
        (1, 1), lambda i: (0, 0), memory_space=pltpu.MemorySpace.SMEM
    )
    out = pl.pallas_call(
        affine_kernel,
        out_shape=jax.ShapeDtypeStruct((rows, LANE), jnp.float32),
        grid=grid,
        in_specs=[
            smem_scalar,                                          # scale
            smem_scalar,                                          # offset
            pl.BlockSpec((block_rows, LANE), lambda i: (i, 0)),   # x slab
        ],
        out_specs=pl.BlockSpec((block_rows, LANE), lambda i: (i, 0)),
        compiler_params=pltpu.CompilerParams(
            dimension_semantics=("parallel",),
        ),
    )(scale, offset, x2d)

    flat_out = out.reshape(-1)
    if padded != B:
        flat_out = flat_out[:B]
    return flat_out.reshape(B, 1)


def init_params(key):
    """Deterministic init mimicking PyTorch Linear default U[-1/sqrt(fan_in), +]."""
    k1, k2, k3, k4 = jax.random.split(key, 4)
    # linear1: in=1, out=10
    bound1 = 1.0  # 1/sqrt(1)
    w1 = jax.random.uniform(k1, (1, 10), jnp.float32, -bound1, bound1)
    b1 = jax.random.uniform(k2, (1, 10), jnp.float32, -bound1, bound1)
    # linear2: in=10, out=1
    bound2 = 1.0 / jnp.sqrt(10.0)
    w2 = jax.random.uniform(k3, (10, 1), jnp.float32, -bound2, bound2)
    b2 = jax.random.uniform(k4, (1, 1), jnp.float32, -bound2, bound2)
    return w1, b1, w2, b2


if __name__ == "__main__":
    key = jax.random.PRNGKey(0)
    w1, b1, w2, b2 = init_params(key)

    def ref(xx):
        return (xx @ w1 + b1) @ w2 + b2

    # 1) hour_var-style tiny batch (exercises the small-batch fast path).
    x = jnp.array([[4.0], [2.0]], dtype=jnp.float32)  # (B=2, F=1)
    y = jax.block_until_ready(model_forward(x, w1, b1, w2, b2))
    assert y.shape == (2, 1)
    assert jnp.allclose(y, ref(x), atol=1e-5, rtol=1e-5)

    # 2) Force the Pallas path on a batch whose flat length needs lane padding
    #    (B=1000 -> padded to 1024, single (8,128) block).
    xb = jax.random.normal(jax.random.PRNGKey(1), (1000, 1), jnp.float32)
    yb = jax.block_until_ready(
        model_forward(xb, w1, b1, w2, b2, min_pallas_bytes=0)
    )
    assert yb.shape == (1000, 1)
    assert jnp.allclose(yb, ref(xb), atol=1e-5, rtol=1e-5)

    # 3) Batch large enough to take the Pallas path naturally; B % 128 == 0 so
    #    there is no pad / slice pass, and the grid has 2 steps with a masked
    #    partial last block.
    xc = jax.random.normal(jax.random.PRNGKey(2), (400_000, 1), jnp.float32)
    yc = jax.block_until_ready(model_forward(xc, w1, b1, w2, b2))
    assert yc.shape == (400_000, 1)
    assert jnp.allclose(yc, ref(xc), atol=1e-4, rtol=1e-4)

    print("KERNEL_OK")
</pallas_src>

<mosaic_0001>
module attributes {stable_mosaic.version = 11 : i64} {
  func.func @affine_kernel(%arg0: i32, %arg1: memref<1x1xf32, #tpu.memory_space<smem>>, %arg2: memref<1x1xf32, #tpu.memory_space<smem>>, %arg3: memref<8x128xf32, #tpu.memory_space<vmem>>, %arg4: memref<8x128xf32, #tpu.memory_space<vmem>>) attributes {dimension_semantics = [#tpu.dimension_semantics<parallel>], iteration_bounds = array<i64: 1>, scalar_prefetch = 0 : i64, scratch_operands = 0 : i64, tpu.core_type = #tpu.core_type<tc>, window_params = [{transform_indices = @transform_0, window_bounds = array<i64: 1, 1>}, {transform_indices = @transform_1, window_bounds = array<i64: 1, 1>}, {transform_indices = @transform_2, window_bounds = array<i64: 8, 128>}, {transform_indices = @transform_3, window_bounds = array<i64: 8, 128>}]} {
    %c0 = arith.constant 0 : index
    %c0_0 = arith.constant 0 : index
    %0 = vector.load %arg3[%c0, %c0_0] : memref<8x128xf32, #tpu.memory_space<vmem>>, vector<8x128xf32>
    %c0_1 = arith.constant 0 : index
    %c0_2 = arith.constant 0 : index
    %1 = memref.load %arg1[%c0_1, %c0_2] : memref<1x1xf32, #tpu.memory_space<smem>>
    %2 = vector.broadcast %1 : f32 to vector<8x128xf32>
    %3 = arith.mulf %0, %2 : vector<8x128xf32>
    %c0_3 = arith.constant 0 : index
    %c0_4 = arith.constant 0 : index
    %4 = memref.load %arg2[%c0_3, %c0_4] : memref<1x1xf32, #tpu.memory_space<smem>>
    %5 = vector.broadcast %4 : f32 to vector<8x128xf32>
    %6 = arith.addf %3, %5 : vector<8x128xf32>
    %c0_5 = arith.constant 0 : index
    %c0_6 = arith.constant 0 : index
    %7 = vector.load %arg4[%c0_5, %c0_6] : memref<8x128xf32, #tpu.memory_space<vmem>>, vector<8x128xf32>
    tpu.vector_store %arg4[%c0_5, %c0_6], %6 {strides = array<i32>} : memref<8x128xf32, #tpu.memory_space<vmem>>, vector<8x128xf32>,
    return
  }
  func.func @transform_0(%arg0: i32) -> (i32, i32) {
    %c0_i32 = arith.constant 0 : i32
    %c0_i32_0 = arith.constant 0 : i32
    %c0_i32_1 = arith.constant 0 : i32
    return %c0_i32, %c0_i32_0 : i32, i32
  }
  func.func @transform_1(%arg0: i32) -> (i32, i32) {
    %c0_i32 = arith.constant 0 : i32
    %c0_i32_0 = arith.constant 0 : i32
    %c0_i32_1 = arith.constant 0 : i32
    return %c0_i32, %c0_i32_0 : i32, i32
  }
  func.func @transform_2(%arg0: i32) -> (i32, i32) {
    %c0_i32 = arith.constant 0 : i32
    %c0_i32_0 = arith.constant 0 : i32
    return %arg0, %c0_i32 : i32, i32
  }
  func.func @transform_3(%arg0: i32) -> (i32, i32) {
    %c0_i32 = arith.constant 0 : i32
    %c0_i32_0 = arith.constant 0 : i32
    return %arg0, %c0_i32 : i32, i32
  }
}

</mosaic_0001>

<llo_original>
// kernel: tpu_custom_call.1
$region0: #{tpu_custom_call.1}
  #allocation0 [shape = 'u32[]', space=smem, size = 0x4, offset = 0x4, fixed_abs, tag = 'smem constant byte address 0x4 - core index']
  #allocation1 [shape = 'u32[72,128]{1,0:T(1,128)}', space=vmem, size = 0x9000, scoped, tag = 'internal scratch']
  #allocation2 [shape = 'f32[1,1]{1,0:T(1,128)S(6)}', space=smem, size = 0x200, scoped, tag = 'scoped memory for tpu_custom_call.1']
  #allocation3 [shape = 'f32[1,1]{1,0:T(1,128)S(6)}', space=smem, size = 0x200, scoped, tag = 'scoped memory for tpu_custom_call.1']
  %s0 = inlined_call_operand.<no memory space> [shape: f32[1,1], index: 0, kind: input, shape index: {}]
  %s1 = inlined_call_operand.<no memory space> [shape: f32[1,1], index: 1, kind: input, shape index: {}]
  %s2 = inlined_call_operand.hbm [shape: f32[8,128], index: 2, kind: input, shape index: {}]
  %s3 = inlined_call_operand.hbm [shape: f32[8,128], index: 3, kind: output, shape index: {}]
  %s4 = sld [smem:[#allocation0]]
  $region26: #{tpu_custom_call.1} parent=0
    _
  %s6 = ssub.s32 1, %s4
  %s7 = scalar_select 0, %s6, %s4
  %8 = sst [smem:[#allocation2]] %s0
  %9 = sst [smem:[#allocation3]] %s1
  $region1: #{tpu_custom_call.1} parent=0
    #allocation4 [shape = 'u8[4096]{0}', space=vmem, size = 0x1000, scoped, tag = 'input window, operand 2, single buffered']
    #allocation5 [shape = 's32[1]{0}', space=sflag, size = 0x4, scoped, tag = 'scoped memory for tpu_custom_call.1']
    #allocation6 [shape = 's32[1]{0}', space=sflag, size = 0x4, scoped, tag = 'scoped memory for tpu_custom_call.1']
    #allocation7 [shape = 'u8[4096]{0}', space=vmem, size = 0x1000, scoped, tag = 'output window, operand 0, single buffered']
    %10 = vsyncpa [#allocation5], 0
    %11 = vsyncpa [#allocation6], 0
    // Predicated region
    $region2: #{tpu_custom_call.1} parent=1 // pred_check
      _
    $region3: #{tpu_custom_call.1} parent=1 // pred_check_branch
      %13 = sbr.rel (0) target = $region5
    $region4: #{tpu_custom_call.1} parent=1 // pred_region
      _
    $region5: #{tpu_custom_call.1} parent=1 // pred_fallthru
      _
    // Predicated region
    $region6: #{tpu_custom_call.1} parent=1 // pred_check
      _
    $region7: #{tpu_custom_call.1} parent=1 // pred_check_branch
      %15 = sbr.rel (0) target = $region9
    $region8: #{tpu_custom_call.1} parent=1 // pred_region
      _
    $region9: #{tpu_custom_call.1} parent=1 // pred_fallthru
      _
    // Predicated region
    $region10: #{tpu_custom_call.1} parent=1 // pred_check
      _
    $region11: #{tpu_custom_call.1} parent=1 // pred_check_branch
      %17 = sbr.rel (0) target = $region13
    $region12: #{tpu_custom_call.1} parent=1 // pred_region
      %19 = vsyncadd [#allocation5], 0
      %s21 = sshll.u32 %s2, 4
      %s22 = int_to_ptr.hbm [resolvable:$true] %s21
      %s23 = sshll.u32 [#allocation4], 4
      %s24 = int_to_ptr.vmem [resolvable:$true] %s23
      %26 = dma.hbm_to_vmem [thread:$0]  %s22, 128, %s24, [#allocation5]
    $region13: #{tpu_custom_call.1} parent=1 // pred_fallthru
      _
    // Predicated region
    $region14: #{tpu_custom_call.1} parent=1 // pred_check
      _
    $region15: #{tpu_custom_call.1} parent=1 // pred_check_branch
      %28 = sbr.rel (0) target = $region17
    $region16: #{tpu_custom_call.1} parent=1 // pred_region
      %30 = dma.done [#allocation5], 128
    $region17: #{tpu_custom_call.1} parent=1 // pred_fallthru
      _
    %v31 = vld [vmem:[#allocation4] sm:$0xff]
    %s32 = sld [smem:[#allocation2]]
    %v33 = vstv %s32
    %v34 = vmul.f32 %v31, %v33
    %s35 = sld [smem:[#allocation3]]
    %v36 = vstv %s35
    %v37 = vadd.f32 %v34, %v36
    %38 = vst [vmem:[#allocation7] sm:$0xff] %v37
    // Predicated region
    $region18: #{tpu_custom_call.1} parent=1 // pred_check
      _
    $region19: #{tpu_custom_call.1} parent=1 // pred_check_branch
      %40 = sbr.rel (0) target = $region21
    $region20: #{tpu_custom_call.1} parent=1 // pred_region
      %42 = vsyncadd [#allocation6], 0
      %s44 = sshll.u32 [#allocation7], 4
      %s45 = int_to_ptr.vmem [resolvable:$true] %s44
      %s46 = sshll.u32 %s3, 4
      %s47 = int_to_ptr.hbm [resolvable:$true] %s46
      %49 = dma.vmem_to_hbm [thread:$0]  %s45, 128, %s47, [#allocation6]
    $region21: #{tpu_custom_call.1} parent=1 // pred_fallthru
      _
    // Predicated region
    $region22: #{tpu_custom_call.1} parent=1 // pred_check
      _
    $region23: #{tpu_custom_call.1} parent=1 // pred_check_branch
      %51 = sbr.rel (0) target = $region25
    $region24: #{tpu_custom_call.1} parent=1 // pred_region
      %53 = dma.done [#allocation6], 128
    $region25: #{tpu_custom_call.1} parent=1 // pred_fallthru
      _
    %54 = vsyncpa [#allocation5], 1
    %55 = vsyncpa [#allocation6], 1

</llo_original>
